<compile_context>
chip_gen: v7x
topology: tpu7x:2x2x1
jax: 0.10.0
libtpu: 0.0.40
codegen_flags: <defaults>
</compile_context>

<pallas_src>
import jax
import jax.numpy as jnp
from jax.experimental import pallas as pl
from jax.experimental.pallas import tpu as pltpu

CANDIDATE_WIDTH = [16, 32, 64, 96]
OVERLAP = 1.0


def _tprojection_kernel(pt_ref, w_ref, q_ref, o_ref):
    # pt_ref: (cout_p, cout)      -- P^T, pre-transposed in the wrapper
    # w_ref : (cout, kk*cin)      -- meta laid out as (cout, k, k, cin), flattened
    # q_ref : (cin, cin_p)
    # o_ref : (cout_p, kk*cin_p)  -- lane-dense output slab
    cin, cin_p = q_ref.shape
    kk = w_ref.shape[1] // cin

    # ---- stage 1 (MXU): contract the meta OUTPUT channels --------------------
    # c[x, s*cin + j] = sum_i P[i, x] * meta[i, j, h, w]   (s = h*kw + w)
    c = jnp.dot(pt_ref[...], w_ref[...], preferred_element_type=jnp.float32)

    # ---- stage 2 (MXU): contract the meta INPUT channels ---------------------
    # kk statically-unrolled small matmuls on contiguous lane slices of c; the
    # partial results are concatenated in-register so the store below is ONE
    # dense full-slab vst (no masked narrow stores).
    q = q_ref[...]
    parts = [
        jnp.dot(c[:, s * cin:(s + 1) * cin], q, preferred_element_type=jnp.float32)
        for s in range(kk)
    ]
    out = jnp.concatenate(parts, axis=1)                    # (cout_p, kk*cin_p)
    o_ref[...] = out.astype(o_ref.dtype)


@jax.jit
def t_projection_batched(meta_weights, P, Q):
    """Batched projection of L same-shape layers.

    meta_weights: (L, cout, cin, k, k), P: (L, cout, cout_p), Q: (L, cin, cin_p)
    -> (L, cout_p, cin_p, k, k)
    """
    L, cout, cin, kh, kw = meta_weights.shape
    cout_p = P.shape[-1]
    cin_p = Q.shape[-1]
    kk = kh * kw
    out_dtype = jnp.promote_types(jnp.promote_types(meta_weights.dtype, P.dtype),
                                  Q.dtype)

    # Wrapper-side layout prep (tiny XLA ops, free relative to the kernel):
    #   W'[l, i, (h*kw + w)*cin + j] = meta[l, i, j, h, w]
    w2d = meta_weights.transpose(0, 1, 3, 4, 2).reshape(L, cout, kk * cin)
    pt = P.transpose(0, 2, 1)                                # (L, cout_p, cout)

    out2d = pl.pallas_call(
        _tprojection_kernel,
        out_shape=jax.ShapeDtypeStruct((L, cout_p, kk * cin_p), out_dtype),
        grid=(L,),
        in_specs=[
            pl.BlockSpec((None, cout_p, cout), lambda l: (l, 0, 0)),
            pl.BlockSpec((None, cout, kk * cin), lambda l: (l, 0, 0)),
            pl.BlockSpec((None, cin, cin_p), lambda l: (l, 0, 0)),
        ],
        out_specs=pl.BlockSpec((None, cout_p, kk * cin_p), lambda l: (l, 0, 0)),
        compiler_params=pltpu.CompilerParams(
            dimension_semantics=("parallel",),
            # Actual per-step footprint is <2 MiB even at width 96; keep the
            # scoped reservation tight for v7x's 64 MiB VMEM.
            vmem_limit_bytes=8 * 1024 * 1024),
    )(pt, w2d, Q)

    # (L, cout_p, kk*cin_p) -> (L, cout_p, kk, cin_p) -> (L, cout_p, cin_p, kk)
    out = out2d.reshape(L, cout_p, kk, cin_p).transpose(0, 1, 3, 2)
    return out.reshape(L, cout_p, cin_p, kh, kw)


@jax.jit
def t_projection(meta_weights, P, Q):
    """project(meta_weights, P, Q):
       (cout,cin,k,k),(cout,cout_p),(cin,cin_p) -> (cout_p,cin_p,k,k)."""
    return t_projection_batched(meta_weights[None], P[None], Q[None])[0]


def _init_projection(key, meta_c, curr_c,
                     candidate_width=CANDIDATE_WIDTH, overlap=OVERLAP):
    """Mirrors TProjection._init_projection (block identity + 0.001*randn)."""
    if meta_c == curr_c == 3:
        base = jnp.eye(3, dtype=jnp.float32)
    else:
        ind = candidate_width.index(curr_c)
        cum_c = sum(int((1 - overlap) * candidate_width[i]) for i in range(ind))
        base = jnp.zeros((meta_c, curr_c), jnp.float32)
        base = base.at[cum_c:cum_c + curr_c, :].set(
            jnp.eye(curr_c, dtype=jnp.float32))
    return base + 0.001 * jax.random.normal(key, (meta_c, curr_c),
                                            dtype=jnp.float32)


def _reference(meta_weights, P, Q):
    """Pure-JAX reference: project() == einsum('ijhw,ix,jy->xyhw', W, P, Q)."""
    return jnp.einsum('ijhw,ix,jy->xyhw', meta_weights, P, Q)


if __name__ == "__main__":
    # Small deterministic config consistent with the module: meta widths
    # (cout, cin) = (32, 16), projected widths from CANDIDATE_WIDTH
    # (cout_p, cin_p) = (16, 16), 3x3 conv kernel.
    cout, cout_p = 32, 16
    cin, cin_p = 16, 16
    k = 3

    key = jax.random.PRNGKey(0)
    k_w, k_p, k_q, k_w2, k_p2, k_q2 = jax.random.split(key, 6)

    meta_weights = jax.random.normal(k_w, (cout, cin, k, k), dtype=jnp.float32)
    P = _init_projection(k_p, cout, cout_p)   # (cout, cout_p)
    Q = _init_projection(k_q, cin, cin_p)     # (cin, cin_p)

    # --- single-layer path ---------------------------------------------------
    out = t_projection(meta_weights, P, Q)
    out = jax.block_until_ready(out)
    ref = _reference(meta_weights, P, Q)
    assert out.shape == (cout_p, cin_p, k, k), out.shape
    assert jnp.allclose(out, ref, atol=1e-4, rtol=1e-4), \
        float(jnp.max(jnp.abs(out - ref)))

    # --- batched path (2 same-shape layers in one pallas_call) ---------------
    meta_b = jnp.stack(
        [meta_weights, jax.random.normal(k_w2, (cout, cin, k, k), jnp.float32)])
    P_b = jnp.stack([P, _init_projection(k_p2, cout, cout_p)])
    Q_b = jnp.stack([Q, _init_projection(k_q2, cin, cin_p)])

    out_b = jax.block_until_ready(t_projection_batched(meta_b, P_b, Q_b))
    ref_b = jnp.stack([_reference(meta_b[l], P_b[l], Q_b[l]) for l in range(2)])
    assert out_b.shape == (2, cout_p, cin_p, k, k), out_b.shape
    assert jnp.allclose(out_b, ref_b, atol=1e-4, rtol=1e-4), \
        float(jnp.max(jnp.abs(out_b - ref_b)))

    print("KERNEL_OK")
</pallas_src>

<mosaic_0001>
module attributes {stable_mosaic.version = 11 : i64} {
  func.func @_tprojection_kernel(%arg0: i32, %arg1: memref<1x16x32xf32, #tpu.memory_space<vmem>>, %arg2: memref<1x32x144xf32, #tpu.memory_space<vmem>>, %arg3: memref<1x16x16xf32, #tpu.memory_space<vmem>>, %arg4: memref<1x16x144xf32, #tpu.memory_space<vmem>>) attributes {dimension_semantics = [#tpu.dimension_semantics<parallel>], iteration_bounds = array<i64: 1>, scalar_prefetch = 0 : i64, scratch_operands = 0 : i64, tpu.core_type = #tpu.core_type<tc>, window_params = [{transform_indices = @transform_0, window_bounds = array<i64: 1, 16, 32>}, {transform_indices = @transform_1, window_bounds = array<i64: 1, 32, 144>}, {transform_indices = @transform_2, window_bounds = array<i64: 1, 16, 16>}, {transform_indices = @transform_3, window_bounds = array<i64: 1, 16, 144>}]} {
    %c0 = arith.constant 0 : index
    %c0_0 = arith.constant 0 : index
    %c0_1 = arith.constant 0 : index
    %0 = vector.load %arg1[%c0, %c0_0, %c0_1] : memref<1x16x32xf32, #tpu.memory_space<vmem>>, vector<1x16x32xf32>
    %1 = vector.shape_cast %0 : vector<1x16x32xf32> to vector<16x32xf32>
    %c0_2 = arith.constant 0 : index
    %c0_3 = arith.constant 0 : index
    %c0_4 = arith.constant 0 : index
    %2 = vector.load %arg2[%c0_2, %c0_3, %c0_4] : memref<1x32x144xf32, #tpu.memory_space<vmem>>, vector<1x32x144xf32>
    %3 = vector.shape_cast %2 : vector<1x32x144xf32> to vector<32x144xf32>
    %cst = arith.constant dense<0.000000e+00> : vector<16x144xf32>
    %4 = tpu.matmul %1, %3, %cst {dimension_numbers = #tpu.dot_dimension_numbers<[1], [0], [0], [1], [0, 0, 1, 1], [], []>} : vector<16x32xf32>, vector<32x144xf32>, vector<16x144xf32> -> vector<16x144xf32>
    %c0_5 = arith.constant 0 : index
    %c0_6 = arith.constant 0 : index
    %c0_7 = arith.constant 0 : index
    %5 = vector.load %arg3[%c0_5, %c0_6, %c0_7] : memref<1x16x16xf32, #tpu.memory_space<vmem>>, vector<1x16x16xf32>
    %6 = vector.shape_cast %5 : vector<1x16x16xf32> to vector<16x16xf32>
    %7 = vector.extract_strided_slice %4 {offsets = [0, 0], sizes = [16, 16], strides = [1, 1]} : vector<16x144xf32> to vector<16x16xf32>
    %cst_8 = arith.constant dense<0.000000e+00> : vector<16x16xf32>
    %8 = tpu.matmul %7, %6, %cst_8 {dimension_numbers = #tpu.dot_dimension_numbers<[1], [0], [0], [1], [0, 0, 1, 1], [], []>} : vector<16x16xf32>, vector<16x16xf32>, vector<16x16xf32> -> vector<16x16xf32>
    %9 = vector.extract_strided_slice %4 {offsets = [0, 16], sizes = [16, 16], strides = [1, 1]} : vector<16x144xf32> to vector<16x16xf32>
    %cst_9 = arith.constant dense<0.000000e+00> : vector<16x16xf32>
    %10 = tpu.matmul %9, %6, %cst_9 {dimension_numbers = #tpu.dot_dimension_numbers<[1], [0], [0], [1], [0, 0, 1, 1], [], []>} : vector<16x16xf32>, vector<16x16xf32>, vector<16x16xf32> -> vector<16x16xf32>
    %11 = vector.extract_strided_slice %4 {offsets = [0, 32], sizes = [16, 16], strides = [1, 1]} : vector<16x144xf32> to vector<16x16xf32>
    %cst_10 = arith.constant dense<0.000000e+00> : vector<16x16xf32>
    %12 = tpu.matmul %11, %6, %cst_10 {dimension_numbers = #tpu.dot_dimension_numbers<[1], [0], [0], [1], [0, 0, 1, 1], [], []>} : vector<16x16xf32>, vector<16x16xf32>, vector<16x16xf32> -> vector<16x16xf32>
    %13 = vector.extract_strided_slice %4 {offsets = [0, 48], sizes = [16, 16], strides = [1, 1]} : vector<16x144xf32> to vector<16x16xf32>
    %cst_11 = arith.constant dense<0.000000e+00> : vector<16x16xf32>
    %14 = tpu.matmul %13, %6, %cst_11 {dimension_numbers = #tpu.dot_dimension_numbers<[1], [0], [0], [1], [0, 0, 1, 1], [], []>} : vector<16x16xf32>, vector<16x16xf32>, vector<16x16xf32> -> vector<16x16xf32>
    %15 = vector.extract_strided_slice %4 {offsets = [0, 64], sizes = [16, 16], strides = [1, 1]} : vector<16x144xf32> to vector<16x16xf32>
    %cst_12 = arith.constant dense<0.000000e+00> : vector<16x16xf32>
    %16 = tpu.matmul %15, %6, %cst_12 {dimension_numbers = #tpu.dot_dimension_numbers<[1], [0], [0], [1], [0, 0, 1, 1], [], []>} : vector<16x16xf32>, vector<16x16xf32>, vector<16x16xf32> -> vector<16x16xf32>
    %17 = vector.extract_strided_slice %4 {offsets = [0, 80], sizes = [16, 16], strides = [1, 1]} : vector<16x144xf32> to vector<16x16xf32>
    %cst_13 = arith.constant dense<0.000000e+00> : vector<16x16xf32>
    %18 = tpu.matmul %17, %6, %cst_13 {dimension_numbers = #tpu.dot_dimension_numbers<[1], [0], [0], [1], [0, 0, 1, 1], [], []>} : vector<16x16xf32>, vector<16x16xf32>, vector<16x16xf32> -> vector<16x16xf32>
    %19 = vector.extract_strided_slice %4 {offsets = [0, 96], sizes = [16, 16], strides = [1, 1]} : vector<16x144xf32> to vector<16x16xf32>
    %cst_14 = arith.constant dense<0.000000e+00> : vector<16x16xf32>
    %20 = tpu.matmul %19, %6, %cst_14 {dimension_numbers = #tpu.dot_dimension_numbers<[1], [0], [0], [1], [0, 0, 1, 1], [], []>} : vector<16x16xf32>, vector<16x16xf32>, vector<16x16xf32> -> vector<16x16xf32>
    %21 = vector.extract_strided_slice %4 {offsets = [0, 112], sizes = [16, 16], strides = [1, 1]} : vector<16x144xf32> to vector<16x16xf32>
    %cst_15 = arith.constant dense<0.000000e+00> : vector<16x16xf32>
    %22 = tpu.matmul %21, %6, %cst_15 {dimension_numbers = #tpu.dot_dimension_numbers<[1], [0], [0], [1], [0, 0, 1, 1], [], []>} : vector<16x16xf32>, vector<16x16xf32>, vector<16x16xf32> -> vector<16x16xf32>
    %23 = vector.extract_strided_slice %4 {offsets = [0, 128], sizes = [16, 16], strides = [1, 1]} : vector<16x144xf32> to vector<16x16xf32>
    %cst_16 = arith.constant dense<0.000000e+00> : vector<16x16xf32>
    %24 = tpu.matmul %23, %6, %cst_16 {dimension_numbers = #tpu.dot_dimension_numbers<[1], [0], [0], [1], [0, 0, 1, 1], [], []>} : vector<16x16xf32>, vector<16x16xf32>, vector<16x16xf32> -> vector<16x16xf32>
    %25 = tpu.concatenate %8, %10, %12, %14, %16, %18, %20, %22, %24 in 1 : vector<16x16xf32>, vector<16x16xf32>, vector<16x16xf32>, vector<16x16xf32>, vector<16x16xf32>, vector<16x16xf32>, vector<16x16xf32>, vector<16x16xf32>, vector<16x16xf32> -> vector<16x144xf32>
    %c0_17 = arith.constant 0 : index
    %c0_18 = arith.constant 0 : index
    %c0_19 = arith.constant 0 : index
    %26 = vector.load %arg4[%c0_17, %c0_18, %c0_19] : memref<1x16x144xf32, #tpu.memory_space<vmem>>, vector<1x16x144xf32>
    %27 = vector.shape_cast %26 : vector<1x16x144xf32> to vector<16x144xf32>
    %28 = vector.shape_cast %25 : vector<16x144xf32> to vector<1x16x144xf32>
    tpu.vector_store %arg4[%c0_17, %c0_18, %c0_19], %28 {strides = array<i32>} : memref<1x16x144xf32, #tpu.memory_space<vmem>>, vector<1x16x144xf32>,
    return
  }
  func.func @transform_0(%arg0: i32) -> (i32, i32, i32) {
    %c0_i32 = arith.constant 0 : i32
    %c0_i32_0 = arith.constant 0 : i32
    %c0_i32_1 = arith.constant 0 : i32
    return %arg0, %c0_i32, %c0_i32_0 : i32, i32, i32
  }
  func.func @transform_1(%arg0: i32) -> (i32, i32, i32) {
    %c0_i32 = arith.constant 0 : i32
    %c0_i32_0 = arith.constant 0 : i32
    %c0_i32_1 = arith.constant 0 : i32
    return %arg0, %c0_i32, %c0_i32_0 : i32, i32, i32
  }
  func.func @transform_2(%arg0: i32) -> (i32, i32, i32) {
    %c0_i32 = arith.constant 0 : i32
    %c0_i32_0 = arith.constant 0 : i32
    %c0_i32_1 = arith.constant 0 : i32
    return %arg0, %c0_i32, %c0_i32_0 : i32, i32, i32
  }
  func.func @transform_3(%arg0: i32) -> (i32, i32, i32) {
    %c0_i32 = arith.constant 0 : i32
    %c0_i32_0 = arith.constant 0 : i32
    %c0_i32_1 = arith.constant 0 : i32
    return %arg0, %c0_i32, %c0_i32_0 : i32, i32, i32
  }
}

</mosaic_0001>

<llo_original>
// kernel: t_projection_batched.1
$region0: #{t_projection_batched.1}
  #allocation0 [shape = 'u32[]', space=smem, size = 0x4, offset = 0x4, fixed_abs, tag = 'smem constant byte address 0x4 - core index']
  #allocation1 [shape = 'u32[144,128]{1,0:T(1,128)}', space=vmem, size = 0x12000, scoped, tag = 'internal scratch']
  %s0 = inlined_call_operand.vmem [shape: f32[1,16,32], index: 0, kind: input, shape index: {}]
  %s1 = inlined_call_operand.vmem [shape: f32[1,32,144], index: 1, kind: input, shape index: {}]
  %s2 = inlined_call_operand.vmem [shape: f32[1,16,16], index: 2, kind: input, shape index: {}]
  %s3 = inlined_call_operand.vmem [shape: f32[1,16,144], index: 3, kind: output, shape index: {}]
  %s4 = sld [smem:[#allocation0]]
  $region22: #{t_projection_batched.1} parent=0
    _
  %s6 = ssub.s32 1, %s4
  %s7 = scalar_select 0, %s6, %s4
  // Predicated region
  $region2: #{t_projection_batched.1} parent=0 // pred_check
    _
  $region3: #{t_projection_batched.1} parent=0 // pred_check_branch
    %9 = sbr.rel (0) target = $region5
  $region4: #{t_projection_batched.1} parent=0 // pred_region
    _
  $region5: #{t_projection_batched.1} parent=0 // pred_fallthru
    _
  // Predicated region
  $region6: #{t_projection_batched.1} parent=0 // pred_check
    _
  $region7: #{t_projection_batched.1} parent=0 // pred_check_branch
    %11 = sbr.rel (0) target = $region9
  $region8: #{t_projection_batched.1} parent=0 // pred_region
    _
  $region9: #{t_projection_batched.1} parent=0 // pred_fallthru
    _
  // Predicated region
  $region10: #{t_projection_batched.1} parent=0 // pred_check
    _
  $region11: #{t_projection_batched.1} parent=0 // pred_check_branch
    %13 = sbr.rel (0) target = $region13
  $region12: #{t_projection_batched.1} parent=0 // pred_region
    _
  $region13: #{t_projection_batched.1} parent=0 // pred_fallthru
    _
  %v14 = vld [vmem:[%s0] sm:$0xff]
  %v15 = vld [vmem:[%s0 + $0x8] sm:$0xff]
  %v16 = vld [vmem:[%s1] sm:$0xff]
  %v17 = vld [vmem:[%s1 + $0x8] sm:$0xff]
  %v18 = vld [vmem:[%s1 + $0x10] sm:$0xff]
  %v19 = vld [vmem:[%s1 + $0x18] sm:$0xff]
  %v20 = vld [vmem:[%s1 + $0x20] sm:$0xff]
  %v21 = vld [vmem:[%s1 + $0x28] sm:$0xff]
  %v22 = vld [vmem:[%s1 + $0x30] sm:$0xff]
  %v23 = vld [vmem:[%s1 + $0x38] sm:$0xff]
  %vm24 = vcmask 261120
  %v26 = vsel %vm24, %v14, 0
  %v29 = vsel %vm24, %v15, 0
  %31 = vmatprep.subr.mxu0 %v17
  %32 = vmatpush1.msra.mxu0 %v16
  %33 = vmatprep.subr.mxu0 %v19
  %34 = vmatpush1.msra.mxu0 %v18
  %35 = vmatprep.subr.mxu0 %v21
  %36 = vmatpush1.msra.mxu0 %v20
  %37 = vmatprep.subr.mxu0 %v23
  %38 = vmatpush1.msra.mxu0 %v22
  %39 = vmatprep.subr.mxu0 0.0
  %40 = vmatpush1.msra.mxu0 0.0
  %41 = vmatprep.subr.mxu0 0.0
  %42 = vmatpush1.msra.mxu0 0.0
  %43 = vmatprep.subr.mxu0 0.0
  %44 = vmatpush1.msra.mxu0 0.0
  %45 = vmatprep.subr.mxu0 0.0
  %46 = vmatpush1.msra.mxu0 0.0
  %47 = vmatprep.subr.mxu0 0.0
  %48 = vmatpush1.msra.mxu0 0.0
  %49 = vmatprep.subr.mxu0 0.0
  %50 = vmatpush1.msra.mxu0 0.0
  %51 = vmatprep.subr.mxu0 0.0
  %52 = vmatpush1.msra.mxu0 0.0
  %53 = vmatprep.subr.mxu0 0.0
  %54 = vmatpush1.msra.mxu0 0.0
  %55 = vmatprep.subr.mxu0 0.0
  %56 = vmatpush1.msra.mxu0 0.0
  %57 = vmatprep.subr.mxu0 0.0
  %58 = vmatpush1.msra.mxu0 0.0
  %59 = vmatprep.subr.mxu0 0.0
  %60 = vmatpush1.msra.mxu0 0.0
  %61 = vmatprep.subr.mxu0 0.0
  %62 = vmatpush1.msra.mxu0 0.0
  %63 = vmatprep.subr.mxu0 0.0
  %64 = vmatpush1.msra.mxu0 0.0
  %65 = vmatprep.subr.mxu0 0.0
  %66 = vmatpush1.msra.mxu0 0.0
  %67 = vmatprep.subr.mxu0 0.0
  %68 = vmatpush1.msra.mxu0 0.0
  %69 = vmatprep.subr.mxu0 0.0
  %70 = vmatpush1.msra.mxu0 0.0
  %71 = vmatprep.subr.mxu0 0.0
  %72 = vmatpush1.msra.mxu0 0.0
  %73 = vmatprep.subr.mxu0 0.0
  %74 = vmatpush1.msra.mxu0 0.0
  %75 = vmatprep.subr.mxu0 0.0
  %76 = vmatpush1.msra.mxu0 0.0
  %77 = vmatprep.subr.mxu0 0.0
  %78 = vmatpush1.msra.mxu0 0.0
  %79 = vmatprep.subr.mxu0 0.0
  %80 = vmatpush1.msra.mxu0 0.0
  %81 = vmatprep.subr.mxu0 0.0
  %82 = vmatpush1.msra.mxu0 0.0
  %83 = vmatprep.subr.mxu0 0.0
  %84 = vmatpush1.msra.mxu0 0.0
  %85 = vmatprep.subr.mxu0 0.0
  %86 = vmatpush1.msra.mxu0 0.0
  %87 = vmatprep.subr.mxu0 0.0
  %88 = vmatpush1.msra.mxu0 0.0
  %89 = vmatprep.subr.mxu0 0.0
  %90 = vmatpush1.msra.mxu0 0.0
  %91 = vmatprep.subr.mxu0 0.0
  %92 = vmatpush1.msra.mxu0 0.0
  %93 = vmatprep.subr.mxu0 0.0
  %94 = vmatpush1.msra.mxu0 0.0
  %95 = vmatprep.mubr.f32.mxu0 0.0
  %96 = vmatmul.mubr.f32.gmra.mrb[0].mxu0 %v26
  %v97 = vpop.f32.mrb[0].mxu0
  %v98 = vadd.f32 0.0, %v97
  %v99 = vpop.f32.mrb[0].mxu0
  %v100 = vadd.f32 0.0, %v99
  %101 = vmatprep.mubr.f32.mxu0 0.0
  %102 = vmatmul.mubr.f32.gmra.mrb[0].mxu0 %v29
  %v103 = vpop.f32.mrb[0].mxu0
  %v104 = vadd.f32 0.0, %v103
  %v105 = vpop.f32.mrb[0].mxu0
  %v106 = vadd.f32 0.0, %v105
  %107 = vdwg.mxu0
  %v108 = vld [vmem:[%s2] sm:$0xff]
  %v109 = vld [vmem:[%s2 + $0x8] sm:$0xff]
  %vm110 = vcmask 130048
  %v112 = vsel %vm110, %v98, 0
  %v115 = vsel %vm110, %v104, 0
  %117 = vmatprep.subr.mxu0 0.0
  %118 = vmatpush1.msra.mxu0 %v108
  %119 = vmatprep.subr.mxu0 0.0
  %120 = vmatpush1.msra.mxu0 %v109
  %121 = vmatprep.subr.mxu0 0.0
  %122 = vmatpush1.msra.mxu0 0.0
  %123 = vmatprep.subr.mxu0 0.0
  %124 = vmatpush1.msra.mxu0 0.0
  %125 = vmatprep.subr.mxu0 0.0
  %126 = vmatpush1.msra.mxu0 0.0
  %127 = vmatprep.subr.mxu0 0.0
  %128 = vmatpush1.msra.mxu0 0.0
  %129 = vmatprep.subr.mxu0 0.0
  %130 = vmatpush1.msra.mxu0 0.0
  %131 = vmatprep.subr.mxu0 0.0
  %132 = vmatpush1.msra.mxu0 0.0
  %133 = vmatprep.subr.mxu0 0.0
  %134 = vmatpush1.msra.mxu0 0.0
  %135 = vmatprep.subr.mxu0 0.0
  %136 = vmatpush1.msra.mxu0 0.0
  %137 = vmatprep.subr.mxu0 0.0
  %138 = vmatpush1.msra.mxu0 0.0
  %139 = vmatprep.subr.mxu0 0.0
  %140 = vmatpush1.msra.mxu0 0.0
  %141 = vmatprep.subr.mxu0 0.0
  %142 = vmatpush1.msra.mxu0 0.0
  %143 = vmatprep.subr.mxu0 0.0
  %144 = vmatpush1.msra.mxu0 0.0
  %145 = vmatprep.subr.mxu0 0.0
  %146 = vmatpush1.msra.mxu0 0.0
  %147 = vmatprep.subr.mxu0 0.0
  %148 = vmatpush1.msra.mxu0 0.0
  %149 = vmatprep.subr.mxu0 0.0
  %150 = vmatpush1.msra.mxu0 0.0
  %151 = vmatprep.subr.mxu0 0.0
  %152 = vmatpush1.msra.mxu0 0.0
  %153 = vmatprep.subr.mxu0 0.0
  %154 = vmatpush1.msra.mxu0 0.0
  %155 = vmatprep.subr.mxu0 0.0
  %156 = vmatpush1.msra.mxu0 0.0
  %157 = vmatprep.subr.mxu0 0.0
  %158 = vmatpush1.msra.mxu0 0.0
  %159 = vmatprep.subr.mxu0 0.0
  %160 = vmatpush1.msra.mxu0 0.0
  %161 = vmatprep.subr.mxu0 0.0
  %162 = vmatpush1.msra.mxu0 0.0
  %163 = vmatprep.subr.mxu0 0.0
  %164 = vmatpush1.msra.mxu0 0.0
  %165 = vmatprep.subr.mxu0 0.0
  %166 = vmatpush1.msra.mxu0 0.0
  %167 = vmatprep.subr.mxu0 0.0
  %168 = vmatpush1.msra.mxu0 0.0
  %169 = vmatprep.subr.mxu0 0.0
  %170 = vmatpush1.msra.mxu0 0.0
  %171 = vmatprep.subr.mxu0 0.0
  %172 = vmatpush1.msra.mxu0 0.0
  %173 = vmatprep.subr.mxu0 0.0
  %174 = vmatpush1.msra.mxu0 0.0
  %175 = vmatprep.subr.mxu0 0.0
  %176 = vmatpush1.msra.mxu0 0.0
  %177 = vmatprep.subr.mxu0 0.0
  %178 = vmatpush1.msra.mxu0 0.0
  %179 = vmatprep.subr.mxu0 0.0
  %180 = vmatpush1.msra.mxu0 0.0
  %181 = vmatprep.mubr.f32.mxu0 0.0
  %182 = vmatmul.mubr.f32.gmra.mrb[0].mxu0 %v112
  %v183 = vpop.f32.mrb[0].mxu0
  %v184 = vadd.f32 0.0, %v183
  %v185 = vpop.f32.mrb[0].mxu0
  %186 = vmatprep.mubr.f32.mxu0 0.0
  %187 = vmatmul.mubr.f32.gmra.mrb[0].mxu0 %v115
  %v188 = vpop.f32.mrb[0].mxu0
  %v189 = vadd.f32 0.0, %v188
  %v190 = vpop.f32.mrb[0].mxu0
  %191 = vdwg.mxu0
  %192 = vrot.lane.b32.xlu0 %v98, 112
  %v193 = vpop.permute.xlu0 %192
  %194 = vrot.lane.b32.xlu0 %v104, 112
  %v195 = vpop.permute.xlu0 %194
  %v196 = vsel %vm110, %v193, 0
  %v198 = vsel %vm110, %v195, 0
  %200 = vmatprep.subr.mxu0 0.0
  %201 = vmatpush1.msra.mxu0 %v108
  %202 = vmatprep.subr.mxu0 0.0
  %203 = vmatpush1.msra.mxu0 %v109
  %204 = vmatprep.subr.mxu0 0.0
  %205 = vmatpush1.msra.mxu0 0.0
  %206 = vmatprep.subr.mxu0 0.0
  %207 = vmatpush1.msra.mxu0 0.0
  %208 = vmatprep.subr.mxu0 0.0
  %209 = vmatpush1.msra.mxu0 0.0
  %210 = vmatprep.subr.mxu0 0.0
  %211 = vmatpush1.msra.mxu0 0.0
  %212 = vmatprep.subr.mxu0 0.0
  %213 = vmatpush1.msra.mxu0 0.0
  %214 = vmatprep.subr.mxu0 0.0
  %215 = vmatpush1.msra.mxu0 0.0
  %216 = vmatprep.subr.mxu0 0.0
  %217 = vmatpush1.msra.mxu0 0.0
  %218 = vmatprep.subr.mxu0 0.0
  %219 = vmatpush1.msra.mxu0 0.0
  %220 = vmatprep.subr.mxu0 0.0
  %221 = vmatpush1.msra.mxu0 0.0
  %222 = vmatprep.subr.mxu0 0.0
  %223 = vmatpush1.msra.mxu0 0.0
  %224 = vmatprep.subr.mxu0 0.0
  %225 = vmatpush1.msra.mxu0 0.0
  %226 = vmatprep.subr.mxu0 0.0
  %227 = vmatpush1.msra.mxu0 0.0
  %228 = vmatprep.subr.mxu0 0.0
  %229 = vmatpush1.msra.mxu0 0.0
  %230 = vmatprep.subr.mxu0 0.0
  %231 = vmatpush1.msra.mxu0 0.0
  %232 = vmatprep.subr.mxu0 0.0
  %233 = vmatpush1.msra.mxu0 0.0
  %234 = vmatprep.subr.mxu0 0.0
  %235 = vmatpush1.msra.mxu0 0.0
  %236 = vmatprep.subr.mxu0 0.0
  %237 = vmatpush1.msra.mxu0 0.0
  %238 = vmatprep.subr.mxu0 0.0
  %239 = vmatpush1.msra.mxu0 0.0
  %240 = vmatprep.subr.mxu0 0.0
  %241 = vmatpush1.msra.mxu0 0.0
  %242 = vmatprep.subr.mxu0 0.0
  %243 = vmatpush1.msra.mxu0 0.0
  %244 = vmatprep.subr.mxu0 0.0
  %245 = vmatpush1.msra.mxu0 0.0
  %246 = vmatprep.subr.mxu0 0.0
  %247 = vmatpush1.msra.mxu0 0.0
  %248 = vmatprep.subr.mxu0 0.0
  %249 = vmatpush1.msra.mxu0 0.0
  %250 = vmatprep.subr.mxu0 0.0
  %251 = vmatpush1.msra.mxu0 0.0
  %252 = vmatprep.subr.mxu0 0.0
  %253 = vmatpush1.msra.mxu0 0.0
  %254 = vmatprep.subr.mxu0 0.0
  %255 = vmatpush1.msra.mxu0 0.0
  %256 = vmatprep.subr.mxu0 0.0
  %257 = vmatpush1.msra.mxu0 0.0
  %258 = vmatprep.subr.mxu0 0.0
  %259 = vmatpush1.msra.mxu0 0.0
  %260 = vmatprep.subr.mxu0 0.0
  %261 = vmatpush1.msra.mxu0 0.0
  %262 = vmatprep.subr.mxu0 0.0
  %263 = vmatpush1.msra.mxu0 0.0
  %264 = vmatprep.mubr.f32.mxu0 0.0
  %265 = vmatmul.mubr.f32.gmra.mrb[0].mxu0 %v196
  %v266 = vpop.f32.mrb[0].mxu0
  %v267 = vadd.f32 0.0, %v266
  %v268 = vpop.f32.mrb[0].mxu0
  %269 = vmatprep.mubr.f32.mxu0 0.0
  %270 = vmatmul.mubr.f32.gmra.mrb[0].mxu0 %v198
  %v271 = vpop.f32.mrb[0].mxu0
  %v272 = vadd.f32 0.0, %v271
  %v273 = vpop.f32.mrb[0].mxu0
  %274 = vdwg.mxu0
  %275 = vrot.lane.b32.xlu0 %v98, 96
  %v276 = vpop.permute.xlu0 %275
  %277 = vrot.lane.b32.xlu0 %v104, 96
  %v278 = vpop.permute.xlu0 %277
  %v279 = vsel %vm110, %v276, 0
  %v281 = vsel %vm110, %v278, 0
  %283 = vmatprep.subr.mxu0 0.0
  %284 = vmatpush1.msra.mxu0 %v108
  %285 = vmatprep.subr.mxu0 0.0
  %286 = vmatpush1.msra.mxu0 %v109
  %287 = vmatprep.subr.mxu0 0.0
  %288 = vmatpush1.msra.mxu0 0.0
  %289 = vmatprep.subr.mxu0 0.0
  %290 = vmatpush1.msra.mxu0 0.0
  %291 = vmatprep.subr.mxu0 0.0
  %292 = vmatpush1.msra.mxu0 0.0
  %293 = vmatprep.subr.mxu0 0.0
  %294 = vmatpush1.msra.mxu0 0.0
  %295 = vmatprep.subr.mxu0 0.0
  %296 = vmatpush1.msra.mxu0 0.0
  %297 = vmatprep.subr.mxu0 0.0
  %298 = vmatpush1.msra.mxu0 0.0
  %299 = vmatprep.subr.mxu0 0.0
  %300 = vmatpush1.msra.mxu0 0.0
  %301 = vmatprep.subr.mxu0 0.0
  %302 = vmatpush1.msra.mxu0 0.0
  %303 = vmatprep.subr.mxu0 0.0
  %304 = vmatpush1.msra.mxu0 0.0
  %305 = vmatprep.subr.mxu0 0.0
  %306 = vmatpush1.msra.mxu0 0.0
  %307 = vmatprep.subr.mxu0 0.0
  %308 = vmatpush1.msra.mxu0 0.0
  %309 = vmatprep.subr.mxu0 0.0
  %310 = vmatpush1.msra.mxu0 0.0
  %311 = vmatprep.subr.mxu0 0.0
  %312 = vmatpush1.msra.mxu0 0.0
  %313 = vmatprep.subr.mxu0 0.0
  %314 = vmatpush1.msra.mxu0 0.0
  %315 = vmatprep.subr.mxu0 0.0
  %316 = vmatpush1.msra.mxu0 0.0
  %317 = vmatprep.subr.mxu0 0.0
  %318 = vmatpush1.msra.mxu0 0.0
  %319 = vmatprep.subr.mxu0 0.0
  %320 = vmatpush1.msra.mxu0 0.0
  %321 = vmatprep.subr.mxu0 0.0
  %322 = vmatpush1.msra.mxu0 0.0
  %323 = vmatprep.subr.mxu0 0.0
  %324 = vmatpush1.msra.mxu0 0.0
  %325 = vmatprep.subr.mxu0 0.0
  %326 = vmatpush1.msra.mxu0 0.0
  %327 = vmatprep.subr.mxu0 0.0
  %328 = vmatpush1.msra.mxu0 0.0
  %329 = vmatprep.subr.mxu0 0.0
  %330 = vmatpush1.msra.mxu0 0.0
  %331 = vmatprep.subr.mxu0 0.0
  %332 = vmatpush1.msra.mxu0 0.0
  %333 = vmatprep.subr.mxu0 0.0
  %334 = vmatpush1.msra.mxu0 0.0
  %335 = vmatprep.subr.mxu0 0.0
  %336 = vmatpush1.msra.mxu0 0.0
  %337 = vmatprep.subr.mxu0 0.0
  %338 = vmatpush1.msra.mxu0 0.0
  %339 = vmatprep.subr.mxu0 0.0
  %340 = vmatpush1.msra.mxu0 0.0
  %341 = vmatprep.subr.mxu0 0.0
  %342 = vmatpush1.msra.mxu0 0.0
  %343 = vmatprep.subr.mxu0 0.0
  %344 = vmatpush1.msra.mxu0 0.0
  %345 = vmatprep.subr.mxu0 0.0
  %346 = vmatpush1.msra.mxu0 0.0
  %347 = vmatprep.mubr.f32.mxu0 0.0
  %348 = vmatmul.mubr.f32.gmra.mrb[0].mxu0 %v279
  %v349 = vpop.f32.mrb[0].mxu0
  %v350 = vadd.f32 0.0, %v349
  %v351 = vpop.f32.mrb[0].mxu0
  %352 = vmatprep.mubr.f32.mxu0 0.0
  %353 = vmatmul.mubr.f32.gmra.mrb[0].mxu0 %v281
  %v354 = vpop.f32.mrb[0].mxu0
  %v355 = vadd.f32 0.0, %v354
  %v356 = vpop.f32.mrb[0].mxu0
  %357 = vdwg.mxu0
  %358 = vrot.lane.b32.xlu0 %v98, 80
  %v359 = vpop.permute.xlu0 %358
  %360 = vrot.lane.b32.xlu0 %v104, 80
  %v361 = vpop.permute.xlu0 %360
  %v362 = vsel %vm110, %v359, 0
  %v364 = vsel %vm110, %v361, 0
  %366 = vmatprep.subr.mxu0 0.0
  %367 = vmatpush1.msra.mxu0 %v108
  %368 = vmatprep.subr.mxu0 0.0
  %369 = vmatpush1.msra.mxu0 %v109
  %370 = vmatprep.subr.mxu0 0.0
  %371 = vmatpush1.msra.mxu0 0.0
  %372 = vmatprep.subr.mxu0 0.0
  %373 = vmatpush1.msra.mxu0 0.0
  %374 = vmatprep.subr.mxu0 0.0
  %375 = vmatpush1.msra.mxu0 0.0
  %376 = vmatprep.subr.mxu0 0.0
  %377 = vmatpush1.msra.mxu0 0.0
  %378 = vmatprep.subr.mxu0 0.0
  %379 = vmatpush1.msra.mxu0 0.0
  %380 = vmatprep.subr.mxu0 0.0
  %381 = vmatpush1.msra.mxu0 0.0
  %382 = vmatprep.subr.mxu0 0.0
  %383 = vmatpush1.msra.mxu0 0.0
  %384 = vmatprep.subr.mxu0 0.0
  %385 = vmatpush1.msra.mxu0 0.0
  %386 = vmatprep.subr.mxu0 0.0
  %387 = vmatpush1.msra.mxu0 0.0
  %388 = vmatprep.subr.mxu0 0.0
  %389 = vmatpush1.msra.mxu0 0.0
  %390 = vmatprep.subr.mxu0 0.0
  %391 = vmatpush1.msra.mxu0 0.0
  %392 = vmatprep.subr.mxu0 0.0
  %393 = vmatpush1.msra.mxu0 0.0
  %394 = vmatprep.subr.mxu0 0.0
  %395 = vmatpush1.msra.mxu0 0.0
  %396 = vmatprep.subr.mxu0 0.0
  %397 = vmatpush1.msra.mxu0 0.0
  %398 = vmatprep.subr.mxu0 0.0
  %399 = vmatpush1.msra.mxu0 0.0
  %400 = vmatprep.subr.mxu0 0.0
  %401 = vmatpush1.msra.mxu0 0.0
  %402 = vmatprep.subr.mxu0 0.0
  %403 = vmatpush1.msra.mxu0 0.0
  %404 = vmatprep.subr.mxu0 0.0
  %405 = vmatpush1.msra.mxu0 0.0
  %406 = vmatprep.subr.mxu0 0.0
  %407 = vmatpush1.msra.mxu0 0.0
  %408 = vmatprep.subr.mxu0 0.0
  %409 = vmatpush1.msra.mxu0 0.0
  %410 = vmatprep.subr.mxu0 0.0
  %411 = vmatpush1.msra.mxu0 0.0
  %412 = vmatprep.subr.mxu0 0.0
  %413 = vmatpush1.msra.mxu0 0.0
  %414 = vmatprep.subr.mxu0 0.0
  %415 = vmatpush1.msra.mxu0 0.0
  %416 = vmatprep.subr.mxu0 0.0
  %417 = vmatpush1.msra.mxu0 0.0
  %418 = vmatprep.subr.mxu0 0.0
  %419 = vmatpush1.msra.mxu0 0.0
  %420 = vmatprep.subr.mxu0 0.0
  %421 = vmatpush1.msra.mxu0 0.0
  %422 = vmatprep.subr.mxu0 0.0
  %423 = vmatpush1.msra.mxu0 0.0
  %424 = vmatprep.subr.mxu0 0.0
  %425 = vmatpush1.msra.mxu0 0.0
  %426 = vmatprep.subr.mxu0 0.0
  %427 = vmatpush1.msra.mxu0 0.0
  %428 = vmatprep.subr.mxu0 0.0
  %429 = vmatpush1.msra.mxu0 0.0
  %430 = vmatprep.mubr.f32.mxu0 0.0
  %431 = vmatmul.mubr.f32.gmra.mrb[0].mxu0 %v362
  %v432 = vpop.f32.mrb[0].mxu0
  %v433 = vadd.f32 0.0, %v432
  %v434 = vpop.f32.mrb[0].mxu0
  %435 = vmatprep.mubr.f32.mxu0 0.0
  %436 = vmatmul.mubr.f32.gmra.mrb[0].mxu0 %v364
  %v437 = vpop.f32.mrb[0].mxu0
  %v438 = vadd.f32 0.0, %v437
  %v439 = vpop.f32.mrb[0].mxu0
  %440 = vdwg.mxu0
  %441 = vrot.lane.b32.xlu0 %v98, 64
  %v442 = vpop.permute.xlu0 %441
  %443 = vrot.lane.b32.xlu0 %v104, 64
  %v444 = vpop.permute.xlu0 %443
  %v445 = vsel %vm110, %v442, 0
  %v447 = vsel %vm110, %v444, 0
  %449 = vmatprep.subr.mxu0 0.0
  %450 = vmatpush1.msra.mxu0 %v108
  %451 = vmatprep.subr.mxu0 0.0
  %452 = vmatpush1.msra.mxu0 %v109
  %453 = vmatprep.subr.mxu0 0.0
  %454 = vmatpush1.msra.mxu0 0.0
  %455 = vmatprep.subr.mxu0 0.0
  %456 = vmatpush1.msra.mxu0 0.0
  %457 = vmatprep.subr.mxu0 0.0
  %458 = vmatpush1.msra.mxu0 0.0
  %459 = vmatprep.subr.mxu0 0.0
  %460 = vmatpush1.msra.mxu0 0.0
  %461 = vmatprep.subr.mxu0 0.0
  %462 = vmatpush1.msra.mxu0 0.0
  %463 = vmatprep.subr.mxu0 0.0
  %464 = vmatpush1.msra.mxu0 0.0
  %465 = vmatprep.subr.mxu0 0.0
  %466 = vmatpush1.msra.mxu0 0.0
  %467 = vmatprep.subr.mxu0 0.0
  %468 = vmatpush1.msra.mxu0 0.0
  %469 = vmatprep.subr.mxu0 0.0
  %470 = vmatpush1.msra.mxu0 0.0
  %471 = vmatprep.subr.mxu0 0.0
  %472 = vmatpush1.msra.mxu0 0.0
  %473 = vmatprep.subr.mxu0 0.0
  %474 = vmatpush1.msra.mxu0 0.0
  %475 = vmatprep.subr.mxu0 0.0
  %476 = vmatpush1.msra.mxu0 0.0
  %477 = vmatprep.subr.mxu0 0.0
  %478 = vmatpush1.msra.mxu0 0.0
  %479 = vmatprep.subr.mxu0 0.0
  %480 = vmatpush1.msra.mxu0 0.0
  %481 = vmatprep.subr.mxu0 0.0
  %482 = vmatpush1.msra.mxu0 0.0
  %483 = vmatprep.subr.mxu0 0.0
  %484 = vmatpush1.msra.mxu0 0.0
  %485 = vmatprep.subr.mxu0 0.0
  %486 = vmatpush1.msra.mxu0 0.0
  %487 = vmatprep.subr.mxu0 0.0
  %488 = vmatpush1.msra.mxu0 0.0
  %489 = vmatprep.subr.mxu0 0.0
  %490 = vmatpush1.msra.mxu0 0.0
  %491 = vmatprep.subr.mxu0 0.0
  %492 = vmatpush1.msra.mxu0 0.0
  %493 = vmatprep.subr.mxu0 0.0
  %494 = vmatpush1.msra.mxu0 0.0
  %495 = vmatprep.subr.mxu0 0.0
  %496 = vmatpush1.msra.mxu0 0.0
  %497 = vmatprep.subr.mxu0 0.0
  %498 = vmatpush1.msra.mxu0 0.0
  %499 = vmatprep.subr.mxu0 0.0
  %500 = vmatpush1.msra.mxu0 0.0
  %501 = vmatprep.subr.mxu0 0.0
  %502 = vmatpush1.msra.mxu0 0.0
  %503 = vmatprep.subr.mxu0 0.0
  %504 = vmatpush1.msra.mxu0 0.0
  %505 = vmatprep.subr.mxu0 0.0
  %506 = vmatpush1.msra.mxu0 0.0
  %507 = vmatprep.subr.mxu0 0.0
  %508 = vmatpush1.msra.mxu0 0.0
  %509 = vmatprep.subr.mxu0 0.0
  %510 = vmatpush1.msra.mxu0 0.0
  %511 = vmatprep.subr.mxu0 0.0
  %512 = vmatpush1.msra.mxu0 0.0
  %513 = vmatprep.mubr.f32.mxu0 0.0
  %514 = vmatmul.mubr.f32.gmra.mrb[0].mxu0 %v445
  %v515 = vpop.f32.mrb[0].mxu0
  %v516 = vadd.f32 0.0, %v515
  %v517 = vpop.f32.mrb[0].mxu0
  %518 = vmatprep.mubr.f32.mxu0 0.0
  %519 = vmatmul.mubr.f32.gmra.mrb[0].mxu0 %v447
  %v520 = vpop.f32.mrb[0].mxu0
  %v521 = vadd.f32 0.0, %v520
  %v522 = vpop.f32.mrb[0].mxu0
  %523 = vdwg.mxu0
  %524 = vrot.lane.b32.xlu0 %v98, 48
  %v525 = vpop.permute.xlu0 %524
  %526 = vrot.lane.b32.xlu0 %v104, 48
  %v527 = vpop.permute.xlu0 %526
  %v528 = vsel %vm110, %v525, 0
  %v530 = vsel %vm110, %v527, 0
  %532 = vmatprep.subr.mxu0 0.0
  %533 = vmatpush1.msra.mxu0 %v108
  %534 = vmatprep.subr.mxu0 0.0
  %535 = vmatpush1.msra.mxu0 %v109
  %536 = vmatprep.subr.mxu0 0.0
  %537 = vmatpush1.msra.mxu0 0.0
  %538 = vmatprep.subr.mxu0 0.0
  %539 = vmatpush1.msra.mxu0 0.0
  %540 = vmatprep.subr.mxu0 0.0
  %541 = vmatpush1.msra.mxu0 0.0
  %542 = vmatprep.subr.mxu0 0.0
  %543 = vmatpush1.msra.mxu0 0.0
  %544 = vmatprep.subr.mxu0 0.0
  %545 = vmatpush1.msra.mxu0 0.0
  %546 = vmatprep.subr.mxu0 0.0
  %547 = vmatpush1.msra.mxu0 0.0
  %548 = vmatprep.subr.mxu0 0.0
  %549 = vmatpush1.msra.mxu0 0.0
  %550 = vmatprep.subr.mxu0 0.0
  %551 = vmatpush1.msra.mxu0 0.0
  %552 = vmatprep.subr.mxu0 0.0
  %553 = vmatpush1.msra.mxu0 0.0
  %554 = vmatprep.subr.mxu0 0.0
  %555 = vmatpush1.msra.mxu0 0.0
  %556 = vmatprep.subr.mxu0 0.0
  %557 = vmatpush1.msra.mxu0 0.0
  %558 = vmatprep.subr.mxu0 0.0
  %559 = vmatpush1.msra.mxu0 0.0
  %560 = vmatprep.subr.mxu0 0.0
  %561 = vmatpush1.msra.mxu0 0.0
  %562 = vmatprep.subr.mxu0 0.0
  %563 = vmatpush1.msra.mxu0 0.0
  %564 = vmatprep.subr.mxu0 0.0
  %565 = vmatpush1.msra.mxu0 0.0
  %566 = vmatprep.subr.mxu0 0.0
  %567 = vmatpush1.msra.mxu0 0.0
  %568 = vmatprep.subr.mxu0 0.0
  %569 = vmatpush1.msra.mxu0 0.0
  %570 = vmatprep.subr.mxu0 0.0
  %571 = vmatpush1.msra.mxu0 0.0
  %572 = vmatprep.subr.mxu0 0.0
  %573 = vmatpush1.msra.mxu0 0.0
  %574 = vmatprep.subr.mxu0 0.0
  %575 = vmatpush1.msra.mxu0 0.0
  %576 = vmatprep.subr.mxu0 0.0
  %577 = vmatpush1.msra.mxu0 0.0
  %578 = vmatprep.subr.mxu0 0.0
  %579 = vmatpush1.msra.mxu0 0.0
  %580 = vmatprep.subr.mxu0 0.0
  %581 = vmatpush1.msra.mxu0 0.0
  %582 = vmatprep.subr.mxu0 0.0
  %583 = vmatpush1.msra.mxu0 0.0
  %584 = vmatprep.subr.mxu0 0.0
  %585 = vmatpush1.msra.mxu0 0.0
  %586 = vmatprep.subr.mxu0 0.0
  %587 = vmatpush1.msra.mxu0 0.0
  %588 = vmatprep.subr.mxu0 0.0
  %589 = vmatpush1.msra.mxu0 0.0
  %590 = vmatprep.subr.mxu0 0.0
  %591 = vmatpush1.msra.mxu0 0.0
  %592 = vmatprep.subr.mxu0 0.0
  %593 = vmatpush1.msra.mxu0 0.0
  %594 = vmatprep.subr.mxu0 0.0
  %595 = vmatpush1.msra.mxu0 0.0
  %596 = vmatprep.mubr.f32.mxu0 0.0
  %597 = vmatmul.mubr.f32.gmra.mrb[0].mxu0 %v528
  %v598 = vpop.f32.mrb[0].mxu0
  %v599 = vadd.f32 0.0, %v598
  %v600 = vpop.f32.mrb[0].mxu0
  %601 = vmatprep.mubr.f32.mxu0 0.0
  %602 = vmatmul.mubr.f32.gmra.mrb[0].mxu0 %v530
  %v603 = vpop.f32.mrb[0].mxu0
  %v604 = vadd.f32 0.0, %v603
  %v605 = vpop.f32.mrb[0].mxu0
  %606 = vdwg.mxu0
  %607 = vrot.lane.b32.xlu0 %v98, 32
  %v608 = vpop.permute.xlu0 %607
  %609 = vrot.lane.b32.xlu0 %v104, 32
  %v610 = vpop.permute.xlu0 %609
  %v611 = vsel %vm110, %v608, 0
  %v613 = vsel %vm110, %v610, 0
  %615 = vmatprep.subr.mxu0 0.0
  %616 = vmatpush1.msra.mxu0 %v108
  %617 = vmatprep.subr.mxu0 0.0
  %618 = vmatpush1.msra.mxu0 %v109
  %619 = vmatprep.subr.mxu0 0.0
  %620 = vmatpush1.msra.mxu0 0.0
  %621 = vmatprep.subr.mxu0 0.0
  %622 = vmatpush1.msra.mxu0 0.0
  %623 = vmatprep.subr.mxu0 0.0
  %624 = vmatpush1.msra.mxu0 0.0
  %625 = vmatprep.subr.mxu0 0.0
  %626 = vmatpush1.msra.mxu0 0.0
  %627 = vmatprep.subr.mxu0 0.0
  %628 = vmatpush1.msra.mxu0 0.0
  %629 = vmatprep.subr.mxu0 0.0
  %630 = vmatpush1.msra.mxu0 0.0
  %631 = vmatprep.subr.mxu0 0.0
  %632 = vmatpush1.msra.mxu0 0.0
  %633 = vmatprep.subr.mxu0 0.0
  %634 = vmatpush1.msra.mxu0 0.0
  %635 = vmatprep.subr.mxu0 0.0
  %636 = vmatpush1.msra.mxu0 0.0
  %637 = vmatprep.subr.mxu0 0.0
  %638 = vmatpush1.msra.mxu0 0.0
  %639 = vmatprep.subr.mxu0 0.0
  %640 = vmatpush1.msra.mxu0 0.0
  %641 = vmatprep.subr.mxu0 0.0
  %642 = vmatpush1.msra.mxu0 0.0
  %643 = vmatprep.subr.mxu0 0.0
  %644 = vmatpush1.msra.mxu0 0.0
  %645 = vmatprep.subr.mxu0 0.0
  %646 = vmatpush1.msra.mxu0 0.0
  %647 = vmatprep.subr.mxu0 0.0
  %648 = vmatpush1.msra.mxu0 0.0
  %649 = vmatprep.subr.mxu0 0.0
  %650 = vmatpush1.msra.mxu0 0.0
  %651 = vmatprep.subr.mxu0 0.0
  %652 = vmatpush1.msra.mxu0 0.0
  %653 = vmatprep.subr.mxu0 0.0
  %654 = vmatpush1.msra.mxu0 0.0
  %655 = vmatprep.subr.mxu0 0.0
  %656 = vmatpush1.msra.mxu0 0.0
  %657 = vmatprep.subr.mxu0 0.0
  %658 = vmatpush1.msra.mxu0 0.0
  %659 = vmatprep.subr.mxu0 0.0
  %660 = vmatpush1.msra.mxu0 0.0
  %661 = vmatprep.subr.mxu0 0.0
  %662 = vmatpush1.msra.mxu0 0.0
  %663 = vmatprep.subr.mxu0 0.0
  %664 = vmatpush1.msra.mxu0 0.0
  %665 = vmatprep.subr.mxu0 0.0
  %666 = vmatpush1.msra.mxu0 0.0
  %667 = vmatprep.subr.mxu0 0.0
  %668 = vmatpush1.msra.mxu0 0.0
  %669 = vmatprep.subr.mxu0 0.0
  %670 = vmatpush1.msra.mxu0 0.0
  %671 = vmatprep.subr.mxu0 0.0
  %672 = vmatpush1.msra.mxu0 0.0
  %673 = vmatprep.subr.mxu0 0.0
  %674 = vmatpush1.msra.mxu0 0.0
  %675 = vmatprep.subr.mxu0 0.0
  %676 = vmatpush1.msra.mxu0 0.0
  %677 = vmatprep.subr.mxu0 0.0
  %678 = vmatpush1.msra.mxu0 0.0
  %679 = vmatprep.mubr.f32.mxu0 0.0
  %680 = vmatmul.mubr.f32.gmra.mrb[0].mxu0 %v611
  %v681 = vpop.f32.mrb[0].mxu0
  %v682 = vadd.f32 0.0, %v681
  %v683 = vpop.f32.mrb[0].mxu0
  %684 = vmatprep.mubr.f32.mxu0 0.0
  %685 = vmatmul.mubr.f32.gmra.mrb[0].mxu0 %v613
  %v686 = vpop.f32.mrb[0].mxu0
  %v687 = vadd.f32 0.0, %v686
  %v688 = vpop.f32.mrb[0].mxu0
  %689 = vdwg.mxu0
  %690 = vrot.lane.b32.xlu0 %v98, 16
  %v691 = vpop.permute.xlu0 %690
  %692 = vrot.lane.b32.xlu0 %v104, 16
  %v693 = vpop.permute.xlu0 %692
  %v694 = vsel %vm110, %v691, 0
  %v696 = vsel %vm110, %v693, 0
  %698 = vmatprep.subr.mxu0 0.0
  %699 = vmatpush1.msra.mxu0 %v108
  %700 = vmatprep.subr.mxu0 0.0
  %701 = vmatpush1.msra.mxu0 %v109
  %702 = vmatprep.subr.mxu0 0.0
  %703 = vmatpush1.msra.mxu0 0.0
  %704 = vmatprep.subr.mxu0 0.0
  %705 = vmatpush1.msra.mxu0 0.0
  %706 = vmatprep.subr.mxu0 0.0
  %707 = vmatpush1.msra.mxu0 0.0
  %708 = vmatprep.subr.mxu0 0.0
  %709 = vmatpush1.msra.mxu0 0.0
  %710 = vmatprep.subr.mxu0 0.0
  %711 = vmatpush1.msra.mxu0 0.0
  %712 = vmatprep.subr.mxu0 0.0
  %713 = vmatpush1.msra.mxu0 0.0
  %714 = vmatprep.subr.mxu0 0.0
  %715 = vmatpush1.msra.mxu0 0.0
  %716 = vmatprep.subr.mxu0 0.0
  %717 = vmatpush1.msra.mxu0 0.0
  %718 = vmatprep.subr.mxu0 0.0
  %719 = vmatpush1.msra.mxu0 0.0
  %720 = vmatprep.subr.mxu0 0.0
  %721 = vmatpush1.msra.mxu0 0.0
  %722 = vmatprep.subr.mxu0 0.0
  %723 = vmatpush1.msra.mxu0 0.0
  %724 = vmatprep.subr.mxu0 0.0
  %725 = vmatpush1.msra.mxu0 0.0
  %726 = vmatprep.subr.mxu0 0.0
  %727 = vmatpush1.msra.mxu0 0.0
  %728 = vmatprep.subr.mxu0 0.0
  %729 = vmatpush1.msra.mxu0 0.0
  %730 = vmatprep.subr.mxu0 0.0
  %731 = vmatpush1.msra.mxu0 0.0
  %732 = vmatprep.subr.mxu0 0.0
  %733 = vmatpush1.msra.mxu0 0.0
  %734 = vmatprep.subr.mxu0 0.0
  %735 = vmatpush1.msra.mxu0 0.0
  %736 = vmatprep.subr.mxu0 0.0
  %737 = vmatpush1.msra.mxu0 0.0
  %738 = vmatprep.subr.mxu0 0.0
  %739 = vmatpush1.msra.mxu0 0.0
  %740 = vmatprep.subr.mxu0 0.0
  %741 = vmatpush1.msra.mxu0 0.0
  %742 = vmatprep.subr.mxu0 0.0
  %743 = vmatpush1.msra.mxu0 0.0
  %744 = vmatprep.subr.mxu0 0.0
  %745 = vmatpush1.msra.mxu0 0.0
  %746 = vmatprep.subr.mxu0 0.0
  %747 = vmatpush1.msra.mxu0 0.0
  %748 = vmatprep.subr.mxu0 0.0
  %749 = vmatpush1.msra.mxu0 0.0
  %750 = vmatprep.subr.mxu0 0.0
  %751 = vmatpush1.msra.mxu0 0.0
  %752 = vmatprep.subr.mxu0 0.0
  %753 = vmatpush1.msra.mxu0 0.0
  %754 = vmatprep.subr.mxu0 0.0
  %755 = vmatpush1.msra.mxu0 0.0
  %756 = vmatprep.subr.mxu0 0.0
  %757 = vmatpush1.msra.mxu0 0.0
  %758 = vmatprep.subr.mxu0 0.0
  %759 = vmatpush1.msra.mxu0 0.0
  %760 = vmatprep.subr.mxu0 0.0
  %761 = vmatpush1.msra.mxu0 0.0
  %762 = vmatprep.mubr.f32.mxu0 0.0
  %763 = vmatmul.mubr.f32.gmra.mrb[0].mxu0 %v694
  %v764 = vpop.f32.mrb[0].mxu0
  %v765 = vadd.f32 0.0, %v764
  %v766 = vpop.f32.mrb[0].mxu0
  %767 = vmatprep.mubr.f32.mxu0 0.0
  %768 = vmatmul.mubr.f32.gmra.mrb[0].mxu0 %v696
  %v769 = vpop.f32.mrb[0].mxu0
  %v770 = vadd.f32 0.0, %v769
  %v771 = vpop.f32.mrb[0].mxu0
  %772 = vdwg.mxu0
  %v774 = vsel %vm110, %v100, 0
  %v777 = vsel %vm110, %v106, 0
  %779 = vmatprep.subr.mxu0 0.0
  %780 = vmatpush1.msra.mxu0 %v108
  %781 = vmatprep.subr.mxu0 0.0
  %782 = vmatpush1.msra.mxu0 %v109
  %783 = vmatprep.subr.mxu0 0.0
  %784 = vmatpush1.msra.mxu0 0.0
  %785 = vmatprep.subr.mxu0 0.0
  %786 = vmatpush1.msra.mxu0 0.0
  %787 = vmatprep.subr.mxu0 0.0
  %788 = vmatpush1.msra.mxu0 0.0
  %789 = vmatprep.subr.mxu0 0.0
  %790 = vmatpush1.msra.mxu0 0.0
  %791 = vmatprep.subr.mxu0 0.0
  %792 = vmatpush1.msra.mxu0 0.0
  %793 = vmatprep.subr.mxu0 0.0
  %794 = vmatpush1.msra.mxu0 0.0
  %795 = vmatprep.subr.mxu0 0.0
  %796 = vmatpush1.msra.mxu0 0.0
  %797 = vmatprep.subr.mxu0 0.0
  %798 = vmatpush1.msra.mxu0 0.0
  %799 = vmatprep.subr.mxu0 0.0
  %800 = vmatpush1.msra.mxu0 0.0
  %801 = vmatprep.subr.mxu0 0.0
  %802 = vmatpush1.msra.mxu0 0.0
  %803 = vmatprep.subr.mxu0 0.0
  %804 = vmatpush1.msra.mxu0 0.0
  %805 = vmatprep.subr.mxu0 0.0
  %806 = vmatpush1.msra.mxu0 0.0
  %807 = vmatprep.subr.mxu0 0.0
  %808 = vmatpush1.msra.mxu0 0.0
  %809 = vmatprep.subr.mxu0 0.0
  %810 = vmatpush1.msra.mxu0 0.0
  %811 = vmatprep.subr.mxu0 0.0
  %812 = vmatpush1.msra.mxu0 0.0
  %813 = vmatprep.subr.mxu0 0.0
  %814 = vmatpush1.msra.mxu0 0.0
  %815 = vmatprep.subr.mxu0 0.0
  %816 = vmatpush1.msra.mxu0 0.0
  %817 = vmatprep.subr.mxu0 0.0
  %818 = vmatpush1.msra.mxu0 0.0
  %819 = vmatprep.subr.mxu0 0.0
  %820 = vmatpush1.msra.mxu0 0.0
  %821 = vmatprep.subr.mxu0 0.0
  %822 = vmatpush1.msra.mxu0 0.0
  %823 = vmatprep.subr.mxu0 0.0
  %824 = vmatpush1.msra.mxu0 0.0
  %825 = vmatprep.subr.mxu0 0.0
  %826 = vmatpush1.msra.mxu0 0.0
  %827 = vmatprep.subr.mxu0 0.0
  %828 = vmatpush1.msra.mxu0 0.0
  %829 = vmatprep.subr.mxu0 0.0
  %830 = vmatpush1.msra.mxu0 0.0
  %831 = vmatprep.subr.mxu0 0.0
  %832 = vmatpush1.msra.mxu0 0.0
  %833 = vmatprep.subr.mxu0 0.0
  %834 = vmatpush1.msra.mxu0 0.0
  %835 = vmatprep.subr.mxu0 0.0
  %836 = vmatpush1.msra.mxu0 0.0
  %837 = vmatprep.subr.mxu0 0.0
  %838 = vmatpush1.msra.mxu0 0.0
  %839 = vmatprep.subr.mxu0 0.0
  %840 = vmatpush1.msra.mxu0 0.0
  %841 = vmatprep.subr.mxu0 0.0
  %842 = vmatpush1.msra.mxu0 0.0
  %843 = vmatprep.mubr.f32.mxu0 0.0
  %844 = vmatmul.mubr.f32.gmra.mrb[0].mxu0 %v774
  %v845 = vpop.f32.mrb[0].mxu0
  %v846 = vadd.f32 0.0, %v845
  %v847 = vpop.f32.mrb[0].mxu0
  %848 = vmatprep.mubr.f32.mxu0 0.0
  %849 = vmatmul.mubr.f32.gmra.mrb[0].mxu0 %v777
  %v850 = vpop.f32.mrb[0].mxu0
  %v851 = vadd.f32 0.0, %v850
  %v852 = vpop.f32.mrb[0].mxu0
  %853 = vdwg.mxu0
  %856 = vrot.lane.b32.xlu0 %v267, 16
  %v857 = vpop.permute.xlu0 %856
  %858 = vrot.lane.b32.xlu0 %v272, 16
  %v859 = vpop.permute.xlu0 %858
  %864 = vrot.lane.b32.xlu0 %v350, 32
  %v865 = vpop.permute.xlu0 %864
  %866 = vrot.lane.b32.xlu0 %v355, 32
  %v867 = vpop.permute.xlu0 %866
  %872 = vrot.lane.b32.xlu0 %v433, 48
  %v873 = vpop.permute.xlu0 %872
  %874 = vrot.lane.b32.xlu0 %v438, 48
  %v875 = vpop.permute.xlu0 %874
  %880 = vrot.lane.b32.xlu0 %v516, 64
  %v881 = vpop.permute.xlu0 %880
  %882 = vrot.lane.b32.xlu0 %v521, 64
  %v883 = vpop.permute.xlu0 %882
  %888 = vrot.lane.b32.xlu0 %v599, 80
  %v889 = vpop.permute.xlu0 %888
  %890 = vrot.lane.b32.xlu0 %v604, 80
  %v891 = vpop.permute.xlu0 %890
  %896 = vrot.lane.b32.xlu0 %v682, 96
  %v897 = vpop.permute.xlu0 %896
  %898 = vrot.lane.b32.xlu0 %v687, 96
  %v899 = vpop.permute.xlu0 %898
  %904 = vrot.lane.b32.xlu0 %v765, 112
  %v905 = vpop.permute.xlu0 %904
  %906 = vrot.lane.b32.xlu0 %v770, 112
  %v907 = vpop.permute.xlu0 %906
  %v910 = vsel %vm110, %v184, %v857
  %v911 = vsel %vm110, %v189, %v859
  %v912 = vsel %vm24, %v910, %v865
  %v913 = vsel %vm24, %v911, %v867
  %vm914 = vcmask 392192
  %v915 = vsel %vm914, %v912, %v873
  %v916 = vsel %vm914, %v913, %v875
  %vm917 = vcmask 523264
  %v918 = vsel %vm917, %v915, %v881
  %v919 = vsel %vm917, %v916, %v883
  %vm920 = vcmask 654336
  %v921 = vsel %vm920, %v918, %v889
  %v922 = vsel %vm920, %v919, %v891
  %vm923 = vcmask 785408
  %v924 = vsel %vm923, %v921, %v897
  %v925 = vsel %vm923, %v922, %v899
  %vm926 = vcmask 916480
  %v927 = vsel %vm926, %v924, %v905
  %v928 = vsel %vm926, %v925, %v907
  %929 = vst [vmem:[%s3] sm:$0xff] %v927
  %930 = vst.msk [vmem:[%s3 + $0x8] sm:$0xff] %vm110, %v846
  %931 = vst [vmem:[%s3 + $0x10] sm:$0xff] %v928
  %932 = vst.msk [vmem:[%s3 + $0x18] sm:$0xff] %vm110, %v851
  // Predicated region
  $region14: #{t_projection_batched.1} parent=0 // pred_check
    _
  $region15: #{t_projection_batched.1} parent=0 // pred_check_branch
    %934 = sbr.rel (0) target = $region17
  $region16: #{t_projection_batched.1} parent=0 // pred_region
    _
  $region17: #{t_projection_batched.1} parent=0 // pred_fallthru
    _
  // Predicated region
  $region18: #{t_projection_batched.1} parent=0 // pred_check
    _
  $region19: #{t_projection_batched.1} parent=0 // pred_check_branch
    %936 = sbr.rel (0) target = $region21
  $region20: #{t_projection_batched.1} parent=0 // pred_region
    _
  $region21: #{t_projection_batched.1} parent=0 // pred_fallthru
    _

</llo_original>
